<compile_context>
chip_gen: v7x
topology: tpu7x:2x2x1
jax: 0.10.0
libtpu: 0.0.40
codegen_flags: <defaults>
</compile_context>

<pallas_src>
import functools

import jax
import jax.numpy as jnp
from jax.experimental import pallas as pl
from jax.experimental.pallas import tpu as pltpu


def _rmsnorm_kernel(x_ref, w_ref, o_ref, *, inv_hidden, eps):
    # x_ref: (row_tile, hidden_blk), w_ref: (1, hidden_blk)
    x = x_ref[...].astype(jnp.float32)
    # sum(x^2) * (1/hidden) with a Python-constant reciprocal; any zero-padded
    # lanes contribute 0, so the mean is over the original hidden dim.
    ms = jnp.sum(x * x, axis=-1, keepdims=True) * inv_hidden   # (row_tile, 1)
    inv = jax.lax.rsqrt(ms + eps)                              # EUP rsqrt
    w = w_ref[...].astype(jnp.float32)                         # (1, hidden_blk)
    o_ref[...] = (w * (x * inv)).astype(o_ref.dtype)


def _round_up(n, m):
    return ((n + m - 1) // m) * m


def _round_down(n, m):
    return (n // m) * m


def rmsnorm(x, weight, eps=1e-8, row_tile=None):
    """RMSNorm over the last axis of x. weight has x.shape[-1] elements."""
    orig_shape = x.shape
    hidden = orig_shape[-1]
    rows = 1
    for d in orig_shape[:-1]:
        rows *= d

    # Empty input: nothing to normalize.
    if rows == 0 or hidden == 0:
        return x

    dsize = jnp.dtype(x.dtype).itemsize
    # Dtype-native sublane packing multiple: f32 -> 8, bf16 -> 16, int8 -> 32.
    sub = 8 * max(1, 4 // dsize)

    x2 = x.reshape(rows, hidden)
    w2 = weight.reshape(1, hidden)

    # ---- hidden / lane axis handling ---------------------------------------
    if hidden % 128 == 0:
        hidden_blk = hidden
        pad_h = 0
    elif hidden < 128:
        # Tiny hidden: zero-pad to one full lane width (lane-dense stores).
        pad_h = 128 - hidden
        hidden_blk = 128
        x2 = jnp.pad(x2, ((0, 0), (0, pad_h)))
        w2 = jnp.pad(w2, ((0, 0), (0, pad_h)))
    else:
        # Large but unaligned hidden: block last dim == full array dim (legal);
        # masked stores are cheaper than an extra HBM pad+slice roundtrip.
        pad_h = 0
        hidden_blk = hidden

    # ---- row tile selection --------------------------------------------------
    # Target ~1M elements per block (4 MiB f32-equivalent working set).
    target_elems = 1024 * 1024
    if row_tile is None:
        row_tile = max(sub, _round_down(target_elems // hidden_blk, sub))
    else:
        row_tile = max(sub, _round_down(int(row_tile), sub))
    row_tile = min(row_tile, _round_up(rows, sub))

    num_tiles = pl.cdiv(rows, row_tile)

    # Megacore/pipelining: only split when there is enough total work; then aim
    # for >= 4 steps so each of v7x's 2 TensorCores gets >= 2 pipelined blocks.
    total_bytes = rows * hidden_blk * dsize
    if total_bytes >= 16 * 1024 * 1024 and num_tiles < 4:
        row_tile = max(sub, _round_down(pl.cdiv(rows, 4), sub))
        row_tile = min(row_tile, _round_up(rows, sub))
        num_tiles = pl.cdiv(rows, row_tile)

    # ---- VMEM budget: 2x in + 2x out (double-buffered) + weight + f32 temps --
    block_io_bytes = row_tile * hidden_blk * dsize
    f32_block_bytes = row_tile * hidden_blk * 4
    w_bytes = hidden_blk * dsize
    vmem_need = 4 * block_io_bytes + 2 * w_bytes + 4 * f32_block_bytes
    # Cap at 48 MiB: safe headroom inside v7x's 64 MiB physical VMEM per core.
    vmem_limit = int(min(48 * 1024 * 1024,
                         max(32 * 1024 * 1024, int(vmem_need * 1.5))))

    # Advisory cost: reflect the actually-DMA'd (tiled/padded) sizes.
    rows_dma = num_tiles * row_tile
    cost = pl.CostEstimate(
        flops=3 * rows * hidden,
        transcendentals=rows,
        bytes_accessed=2 * rows_dma * hidden_blk * dsize + hidden_blk * dsize,
    )

    kernel = functools.partial(
        _rmsnorm_kernel, inv_hidden=1.0 / float(hidden), eps=float(eps))

    out = pl.pallas_call(
        kernel,
        out_shape=jax.ShapeDtypeStruct((rows, hidden_blk), x.dtype),
        grid_spec=pltpu.PrefetchScalarGridSpec(
            num_scalar_prefetch=0,
            grid=(num_tiles,),
            in_specs=[
                pl.BlockSpec((row_tile, hidden_blk), lambda i: (i, 0)),
                pl.BlockSpec((1, hidden_blk), lambda i: (0, 0)),
            ],
            out_specs=pl.BlockSpec((row_tile, hidden_blk), lambda i: (i, 0)),
        ),
        compiler_params=pltpu.CompilerParams(
            dimension_semantics=("parallel",),
            vmem_limit_bytes=vmem_limit,
        ),
        cost_estimate=cost,
    )(x2, w2)

    if pad_h:
        out = out[:, :hidden]
    return out.reshape(orig_shape)


if __name__ == "__main__":
    key = jax.random.PRNGKey(0)
    batch, seq, hidden = 2, 8, 32

    x = jax.random.normal(key, (batch, seq, hidden), dtype=jnp.float32)
    # nn.Parameter(torch.ones(normalized_shape)) -> deterministic ones init
    weight = jnp.ones((hidden,), dtype=jnp.float32)
    eps = 1e-8  # matches the module's default eps=1e-08

    y = rmsnorm(x, weight, eps=eps)
    y = jax.block_until_ready(y)

    # reference check (plain JAX)
    ref = weight * (x * jax.lax.rsqrt(jnp.mean(x * x, axis=-1, keepdims=True) + eps))
    assert y.shape == x.shape and y.dtype == x.dtype
    assert jnp.max(jnp.abs(y - ref)) < 1e-5

    print("KERNEL_OK")
</pallas_src>

<mosaic_0001>
module attributes {stable_mosaic.version = 11 : i64} {
  func.func @_rmsnorm_kernel(%arg0: i32, %arg1: memref<16x128xf32, #tpu.memory_space<vmem>>, %arg2: memref<1x128xf32, #tpu.memory_space<vmem>>, %arg3: memref<16x128xf32, #tpu.memory_space<vmem>>) attributes {dimension_semantics = [#tpu.dimension_semantics<parallel>], iteration_bounds = array<i64: 1>, scalar_prefetch = 0 : i64, scratch_operands = 0 : i64, tpu.core_type = #tpu.core_type<tc>, window_params = [{transform_indices = @transform_0, window_bounds = array<i64: 16, 128>}, {pipeline_mode = #tpu.pipeline_mode<synchronous>, transform_indices = @transform_1, window_bounds = array<i64: 1, 128>}, {transform_indices = @transform_2, window_bounds = array<i64: 16, 128>}]} {
    %c0 = arith.constant 0 : index
    %c0_0 = arith.constant 0 : index
    %0 = vector.load %arg1[%c0, %c0_0] : memref<16x128xf32, #tpu.memory_space<vmem>>, vector<16x128xf32>
    %1 = arith.mulf %0, %0 : vector<16x128xf32>
    %cst = arith.constant dense<0.000000e+00> : vector<16xf32>
    %2 = vector.multi_reduction <add>, %1, %cst [1] : vector<16x128xf32> to vector<16xf32>
    %3 = vector.shape_cast %2 : vector<16xf32> to vector<16x1xf32>
    %cst_1 = arith.constant 3.125000e-02 : f32
    %4 = vector.broadcast %cst_1 : f32 to vector<16x1xf32>
    %5 = arith.mulf %3, %4 : vector<16x1xf32>
    %cst_2 = arith.constant 9.99999993E-9 : f32
    %6 = vector.broadcast %cst_2 : f32 to vector<16x1xf32>
    %7 = arith.addf %5, %6 : vector<16x1xf32>
    %8 = math.rsqrt %7 : vector<16x1xf32>
    %c0_3 = arith.constant 0 : index
    %c0_4 = arith.constant 0 : index
    %9 = vector.load %arg2[%c0_3, %c0_4] : memref<1x128xf32, #tpu.memory_space<vmem>>, vector<1x128xf32>
    %10 = vector.broadcast %8 : vector<16x1xf32> to vector<16x128xf32>
    %11 = arith.mulf %0, %10 : vector<16x128xf32>
    %12 = vector.broadcast %9 : vector<1x128xf32> to vector<16x128xf32>
    %13 = arith.mulf %12, %11 : vector<16x128xf32>
    %c0_5 = arith.constant 0 : index
    %c0_6 = arith.constant 0 : index
    %14 = vector.load %arg3[%c0_5, %c0_6] : memref<16x128xf32, #tpu.memory_space<vmem>>, vector<16x128xf32>
    tpu.vector_store %arg3[%c0_5, %c0_6], %13 {strides = array<i32>} : memref<16x128xf32, #tpu.memory_space<vmem>>, vector<16x128xf32>,
    return
  }
  func.func @transform_0(%arg0: i32) -> (i32, i32) {
    %c0_i32 = arith.constant 0 : i32
    %c0_i32_0 = arith.constant 0 : i32
    return %arg0, %c0_i32 : i32, i32
  }
  func.func @transform_1(%arg0: i32) -> (i32, i32) {
    %c0_i32 = arith.constant 0 : i32
    %c0_i32_0 = arith.constant 0 : i32
    %c0_i32_1 = arith.constant 0 : i32
    return %c0_i32, %c0_i32_0 : i32, i32
  }
  func.func @transform_2(%arg0: i32) -> (i32, i32) {
    %c0_i32 = arith.constant 0 : i32
    %c0_i32_0 = arith.constant 0 : i32
    return %arg0, %c0_i32 : i32, i32
  }
}

</mosaic_0001>

<llo_original>
// kernel: tpu_custom_call.1
$region0: #{tpu_custom_call.1}
  #allocation0 [shape = 'u32[]', space=smem, size = 0x4, offset = 0x4, fixed_abs, tag = 'smem constant byte address 0x4 - core index']
  #allocation1 [shape = 'u32[144,128]{1,0:T(1,128)}', space=vmem, size = 0x12000, scoped, tag = 'internal scratch']
  %s0 = inlined_call_operand.hbm [shape: f32[16,128], index: 0, kind: input, shape index: {}]
  %s1 = inlined_call_operand.vmem [shape: f32[1,128], index: 1, kind: input, shape index: {}]
  %s2 = inlined_call_operand.hbm [shape: f32[16,128], index: 2, kind: output, shape index: {}]
  %s3 = sld [smem:[#allocation0]]
  $region22: #{tpu_custom_call.1} parent=0
    _
  %s5 = ssub.s32 1, %s3
  %s6 = scalar_select 0, %s5, %s3
  $region1: #{tpu_custom_call.1} parent=0
    #allocation2 [shape = 'u8[8192]{0}', space=vmem, size = 0x2000, scoped, tag = 'input window, operand 0, single buffered']
    #allocation3 [shape = 's32[1]{0}', space=sflag, size = 0x4, scoped, tag = 'scoped memory for tpu_custom_call.1']
    #allocation4 [shape = 's32[1]{0}', space=sflag, size = 0x4, scoped, tag = 'scoped memory for tpu_custom_call.1']
    #allocation5 [shape = 'u8[8192]{0}', space=vmem, size = 0x2000, scoped, tag = 'output window, operand 0, single buffered']
    %7 = vsyncpa [#allocation3], 0
    %8 = vsyncpa [#allocation4], 0
    // Predicated region
    $region2: #{tpu_custom_call.1} parent=1 // pred_check
      _
    $region3: #{tpu_custom_call.1} parent=1 // pred_check_branch
      %10 = sbr.rel (0) target = $region5
    $region4: #{tpu_custom_call.1} parent=1 // pred_region
      %s12 = ssub.s32 256, 256
      %13 = vsyncadd [#allocation3], %s12
      %s14 = sshll.u32 [#allocation2], 4
      %s15 = int_to_ptr.vmem [resolvable:$true] %s14
      %20 = dma.hbm_to_vmem [thread:$0]  %s0, 256, %s15, [#allocation3], 128, 128, 8
    $region5: #{tpu_custom_call.1} parent=1 // pred_fallthru
      _
    // Predicated region
    $region6: #{tpu_custom_call.1} parent=1 // pred_check
      _
    $region7: #{tpu_custom_call.1} parent=1 // pred_check_branch
      %22 = sbr.rel (0) target = $region9
    $region8: #{tpu_custom_call.1} parent=1 // pred_region
      _
    $region9: #{tpu_custom_call.1} parent=1 // pred_fallthru
      _
    // Predicated region
    $region10: #{tpu_custom_call.1} parent=1 // pred_check
      _
    $region11: #{tpu_custom_call.1} parent=1 // pred_check_branch
      %24 = sbr.rel (0) target = $region13
    $region12: #{tpu_custom_call.1} parent=1 // pred_region
      %25 = dma.done [#allocation3], 256
    $region13: #{tpu_custom_call.1} parent=1 // pred_fallthru
      _
    %v26 = vld [vmem:[#allocation2] sm:$0xff]
    %v27 = vld [vmem:[#allocation2 + $0x8] sm:$0xff]
    %v28 = vmul.f32 %v26, %v26
    %v29 = vmul.f32 %v27, %v27
    %30 = vadd.xlane.f32.xlu0 %v28
    %v31 = vpop.xlane.xlu0 %30
    %32 = vadd.xlane.f32.xlu0 %v29
    %v33 = vpop.xlane.xlu0 %32
    %v34 = vmul.f32 %v31, 0.03125
    %v35 = vmul.f32 %v33, 0.03125
    %v36 = vadd.f32 %v34, 1e-08
    %v37 = vadd.f32 %v35, 1e-08
    %v38 = vrsqrt.pop %v36
    %v39 = vrsqrt.pop %v37
    %v40 = vld [vmem:[%s1] sm:$0x1]
    %v41 = vmul.f32 %v26, %v38
    %v42 = vmul.f32 %v27, %v39
    %v44 = vlaneseq
    %v45 = vshrl.u32 %v44, 7
    %v46 = vsub.s32 0, %v45
    %v47 = vrot.slane %v40, %v46
    %v49 = vmul.f32 %v47, %v41
    %v50 = vmul.f32 %v47, %v42
    %51 = vst [vmem:[#allocation5] sm:$0xff] %v49
    %52 = vst [vmem:[#allocation5 + $0x8] sm:$0xff] %v50
    // Predicated region
    $region14: #{tpu_custom_call.1} parent=1 // pred_check
      _
    $region15: #{tpu_custom_call.1} parent=1 // pred_check_branch
      %54 = sbr.rel (0) target = $region17
    $region16: #{tpu_custom_call.1} parent=1 // pred_region
      %s56 = ssub.s32 256, 256
      %57 = vsyncadd [#allocation4], %s56
      %s58 = sshll.u32 [#allocation5], 4
      %s59 = int_to_ptr.vmem [resolvable:$true] %s58
      %64 = dma.vmem_to_hbm [thread:$0]  %s59, 256, %s2, [#allocation4], 128, 128, 8
    $region17: #{tpu_custom_call.1} parent=1 // pred_fallthru
      _
    // Predicated region
    $region18: #{tpu_custom_call.1} parent=1 // pred_check
      _
    $region19: #{tpu_custom_call.1} parent=1 // pred_check_branch
      %66 = sbr.rel (0) target = $region21
    $region20: #{tpu_custom_call.1} parent=1 // pred_region
      %67 = dma.done [#allocation4], 256
    $region21: #{tpu_custom_call.1} parent=1 // pred_fallthru
      _
    %68 = vsyncpa [#allocation3], 1
    %69 = vsyncpa [#allocation4], 1

</llo_original>
